<compile_context>
chip_gen: v7x
topology: tpu7x:2x2x1
jax: 0.10.0
libtpu: 0.0.40
codegen_flags: <defaults>
</compile_context>

<pallas_src>
import functools

import jax
import jax.numpy as jnp
from jax import lax
from jax.experimental import pallas as pl
from jax.experimental.pallas import tpu as pltpu

_LANE = 128
_UNIT = 1024                      # batch rows per granule -> (8,128)-aligned blocks
_DEFAULT_TILE_N = 1024 * 1024     # batch rows per grid step (~24 MiB double-buffered)


def _affine_kernel(a_ref, b_ref, x_ref, o_ref):
    """o(R,128) = x(R,256) @ a(256,128) + b.

    Each x row holds 128 interleaved (feature0, feature1) pairs of consecutive
    batch rows; `a` is the sparse de-interleave+weight matrix, so one MXU
    matmul does both the feature combine and the lane compaction, producing a
    lane-dense output tile.  The MXU work (~3 useful FLOPs/row) hides under
    the DMA on all generations.
    """
    y = jnp.dot(
        x_ref[...],
        a_ref[...],
        preferred_element_type=jnp.float32,
        precision=lax.Precision.HIGHEST,
    ) + b_ref[0]
    o_ref[...] = y.astype(o_ref.dtype)


@functools.partial(jax.jit, static_argnames=("tile_n",))
def circular_model_forward(x, params, *, tile_n=_DEFAULT_TILE_N):
    """x: (N, 2) float32 -> (N, 1) float32, matching CircularModel.forward."""
    (w1, b1), (w2, b2), (w3, b3) = params
    n = x.shape[0]

    # Collapse the activation-free stack into one affine map (exact up to f32
    # re-association).
    w_eff = (w1.T @ w2.T @ w3.T).reshape(2).astype(jnp.float32)                   # (2,)
    b_eff = (b1 @ w2.T @ w3.T + b2 @ w3.T + b3).reshape(1).astype(jnp.float32)    # (1,)

    # (256,128) de-interleave + weight matrix: A[2j, j] = w0, A[2j+1, j] = w1.
    a_mat = jnp.kron(jnp.eye(_LANE, dtype=jnp.float32), w_eff.reshape(2, 1))

    # --- batch tiling: lane-dense, (8,128)-aligned blocks ---
    n128 = pl.cdiv(n, _LANE) * _LANE
    n_tiles = pl.cdiv(n128, tile_n)
    if n_tiles == 1:
        tile = n128                                      # single block == full array
    else:
        tile = pl.cdiv(pl.cdiv(n128, n_tiles), _UNIT) * _UNIT
    n_pad = n_tiles * tile
    rows_per_tile = tile // _LANE

    # Free contiguous view: (N,2) row-major -> rows of 128 interleaved pairs.
    x_flat = x.astype(jnp.float32).reshape(-1)           # (2N,)
    if n_pad != n:                                        # pad only when unaligned
        x_flat = jnp.pad(x_flat, (0, 2 * (n_pad - n)))
    x2d = x_flat.reshape(n_pad // _LANE, 2 * _LANE)       # (n_pad/128, 256)

    y2d = pl.pallas_call(
        _affine_kernel,
        out_shape=jax.ShapeDtypeStruct((n_pad // _LANE, _LANE), jnp.float32),
        grid=(n_tiles,),
        in_specs=[
            pl.BlockSpec((2 * _LANE, _LANE), lambda i: (0, 0)),        # a_mat (resident)
            pl.BlockSpec(memory_space=pltpu.MemorySpace.SMEM),         # b_eff scalar
            pl.BlockSpec((rows_per_tile, 2 * _LANE), lambda i: (i, 0)),  # x tile
        ],
        out_specs=pl.BlockSpec((rows_per_tile, _LANE), lambda i: (i, 0)),
        compiler_params=pltpu.CompilerParams(
            dimension_semantics=("parallel",),           # shard batch tiles across TCs
            vmem_limit_bytes=40 * 1024 * 1024,
        ),
    )(a_mat, b_eff, x2d)

    y = y2d.reshape(n_pad, 1)                             # free contiguous reshape
    if n_pad != n:
        y = y[:n]                                         # skipped on aligned batches
    return y


def init_params(key):
    """Deterministic init mimicking nn.Linear default (uniform +-1/sqrt(fan_in))."""
    def linear_init(k, fan_in, fan_out):
        kw, kb = jax.random.split(k)
        bound = 1.0 / jnp.sqrt(jnp.float32(fan_in))
        w = jax.random.uniform(kw, (fan_out, fan_in), jnp.float32, -bound, bound)
        b = jax.random.uniform(kb, (fan_out,), jnp.float32, -bound, bound)
        return w, b

    k1, k2, k3 = jax.random.split(key, 3)
    return (
        linear_init(k1, 2, 10),
        linear_init(k2, 10, 10),
        linear_init(k3, 10, 1),
    )


def reference_forward(x, params):
    (w1, b1), (w2, b2), (w3, b3) = params
    h = x @ w1.T + b1
    h = h @ w2.T + b2
    return h @ w3.T + b3


if __name__ == "__main__":
    # Full-precision f32 matmuls for both reference and the layer-collapse, so
    # the tolerance check is meaningful on TPU.
    jax.config.update("jax_default_matmul_precision", "highest")

    key = jax.random.PRNGKey(0)
    k_params, k_a, k_b, k_c = jax.random.split(key, 4)
    params = init_params(k_params)

    # 1) Small primary check (batch=8, in_features=2): single-tile path.
    x = jax.random.normal(k_a, (8, 2), dtype=jnp.float32)
    out = jax.block_until_ready(circular_model_forward(x, params))
    ref = reference_forward(x, params)
    assert out.shape == (8, 1), out.shape
    assert jnp.allclose(out, ref, atol=1e-5, rtol=1e-5)

    # 2) Multi-tile grid + padded/unaligned tail path.
    x2 = jax.random.normal(k_b, (5000, 2), dtype=jnp.float32)
    out2 = jax.block_until_ready(circular_model_forward(x2, params, tile_n=1024))
    ref2 = reference_forward(x2, params)
    assert out2.shape == (5000, 1), out2.shape
    assert jnp.allclose(out2, ref2, atol=1e-5, rtol=1e-5)

    # 3) Aligned fast path (no pad, no output slice), multi-tile.
    x3 = jax.random.normal(k_c, (4096, 2), dtype=jnp.float32)
    out3 = jax.block_until_ready(circular_model_forward(x3, params, tile_n=1024))
    ref3 = reference_forward(x3, params)
    assert out3.shape == (4096, 1), out3.shape
    assert jnp.allclose(out3, ref3, atol=1e-5, rtol=1e-5)

    print("KERNEL_OK")
</pallas_src>

<mosaic_0001>
module attributes {stable_mosaic.version = 11 : i64} {
  func.func @_affine_kernel(%arg0: i32, %arg1: memref<256x128xf32, #tpu.memory_space<vmem>>, %arg2: memref<1xf32, #tpu.memory_space<smem>>, %arg3: memref<1x256xf32, #tpu.memory_space<vmem>>, %arg4: memref<1x128xf32, #tpu.memory_space<vmem>>) attributes {dimension_semantics = [#tpu.dimension_semantics<parallel>], iteration_bounds = array<i64: 1>, scalar_prefetch = 0 : i64, scratch_operands = 0 : i64, tpu.core_type = #tpu.core_type<tc>, window_params = [{pipeline_mode = #tpu.pipeline_mode<synchronous>, transform_indices = @transform_0, window_bounds = array<i64: 256, 128>}, {transform_indices = @transform_1, window_bounds = array<i64: 1>}, {transform_indices = @transform_2, window_bounds = array<i64: 1, 256>}, {transform_indices = @transform_3, window_bounds = array<i64: 1, 128>}]} {
    %c0 = arith.constant 0 : index
    %c0_0 = arith.constant 0 : index
    %0 = vector.load %arg3[%c0, %c0_0] : memref<1x256xf32, #tpu.memory_space<vmem>>, vector<1x256xf32>
    %c0_1 = arith.constant 0 : index
    %c0_2 = arith.constant 0 : index
    %1 = vector.load %arg1[%c0_1, %c0_2] : memref<256x128xf32, #tpu.memory_space<vmem>>, vector<256x128xf32>
    %cst = arith.constant dense<0.000000e+00> : vector<1x128xf32>
    %2 = tpu.matmul %0, %1, %cst {dimension_numbers = #tpu.dot_dimension_numbers<[1], [0], [0], [1], [0, 0, 1, 1], [], []>, precision = #tpu.contract_precision<fp32>} : vector<1x256xf32>, vector<256x128xf32>, vector<1x128xf32> -> vector<1x128xf32>
    %c0_3 = arith.constant 0 : index
    %3 = memref.load %arg2[%c0_3] : memref<1xf32, #tpu.memory_space<smem>>
    %4 = vector.broadcast %3 : f32 to vector<1x128xf32>
    %5 = arith.addf %2, %4 : vector<1x128xf32>
    %c0_4 = arith.constant 0 : index
    %c0_5 = arith.constant 0 : index
    %6 = vector.load %arg4[%c0_4, %c0_5] : memref<1x128xf32, #tpu.memory_space<vmem>>, vector<1x128xf32>
    tpu.vector_store %arg4[%c0_4, %c0_5], %5 {strides = array<i32>} : memref<1x128xf32, #tpu.memory_space<vmem>>, vector<1x128xf32>,
    return
  }
  func.func @transform_0(%arg0: i32) -> (i32, i32) {
    %c0_i32 = arith.constant 0 : i32
    %c0_i32_0 = arith.constant 0 : i32
    %c0_i32_1 = arith.constant 0 : i32
    return %c0_i32, %c0_i32_0 : i32, i32
  }
  func.func @transform_1(%arg0: i32) -> i32 {
    %c0_i32 = arith.constant 0 : i32
    %c0_i32_0 = arith.constant 0 : i32
    return %c0_i32 : i32
  }
  func.func @transform_2(%arg0: i32) -> (i32, i32) {
    %c0_i32 = arith.constant 0 : i32
    %c0_i32_0 = arith.constant 0 : i32
    return %arg0, %c0_i32 : i32, i32
  }
  func.func @transform_3(%arg0: i32) -> (i32, i32) {
    %c0_i32 = arith.constant 0 : i32
    %c0_i32_0 = arith.constant 0 : i32
    return %arg0, %c0_i32 : i32, i32
  }
}

</mosaic_0001>

<llo_original>
// kernel: circular_model_forward.1
$region0: #{circular_model_forward.1}
  #allocation0 [shape = 'u32[]', space=smem, size = 0x4, offset = 0x4, fixed_abs, tag = 'smem constant byte address 0x4 - core index']
  #allocation1 [shape = 'u32[144,128]{1,0:T(1,128)}', space=vmem, size = 0x12000, scoped, tag = 'internal scratch']
  #allocation2 [shape = 'f32[1]{0:T(128)S(6)}', space=smem, size = 0x200, scoped, tag = 'scoped memory for circular_model_forward.1']
  %s0 = inlined_call_operand.vmem [shape: f32[256,128], index: 0, kind: input, shape index: {}]
  %s1 = inlined_call_operand.<no memory space> [shape: f32[1], index: 1, kind: input, shape index: {}]
  %s2 = inlined_call_operand.vmem [shape: f32[1,256], index: 2, kind: input, shape index: {}]
  %s3 = inlined_call_operand.vmem [shape: f32[1,128], index: 3, kind: output, shape index: {}]
  %s4 = sld [smem:[#allocation0]]
  $region22: #{circular_model_forward.1} parent=0
    _
  %s6 = ssub.s32 1, %s4
  %s7 = scalar_select 0, %s6, %s4
  %8 = sst [smem:[#allocation2]] %s1
  // Predicated region
  $region2: #{circular_model_forward.1} parent=0 // pred_check
    _
  $region3: #{circular_model_forward.1} parent=0 // pred_check_branch
    %10 = sbr.rel (0) target = $region5
  $region4: #{circular_model_forward.1} parent=0 // pred_region
    _
  $region5: #{circular_model_forward.1} parent=0 // pred_fallthru
    _
  // Predicated region
  $region6: #{circular_model_forward.1} parent=0 // pred_check
    _
  $region7: #{circular_model_forward.1} parent=0 // pred_check_branch
    %12 = sbr.rel (0) target = $region9
  $region8: #{circular_model_forward.1} parent=0 // pred_region
    _
  $region9: #{circular_model_forward.1} parent=0 // pred_fallthru
    _
  // Predicated region
  $region10: #{circular_model_forward.1} parent=0 // pred_check
    _
  $region11: #{circular_model_forward.1} parent=0 // pred_check_branch
    %14 = sbr.rel (0) target = $region13
  $region12: #{circular_model_forward.1} parent=0 // pred_region
    _
  $region13: #{circular_model_forward.1} parent=0 // pred_fallthru
    _
  %v15 = vld [vmem:[%s2] sm:$0x3]
  %v16 = vld [vmem:[%s0] sm:$0xff]
  %v17 = vld [vmem:[%s0 + $0x8] sm:$0xff]
  %v18 = vld [vmem:[%s0 + $0x10] sm:$0xff]
  %v19 = vld [vmem:[%s0 + $0x18] sm:$0xff]
  %v20 = vld [vmem:[%s0 + $0x20] sm:$0xff]
  %v21 = vld [vmem:[%s0 + $0x28] sm:$0xff]
  %v22 = vld [vmem:[%s0 + $0x30] sm:$0xff]
  %v23 = vld [vmem:[%s0 + $0x38] sm:$0xff]
  %v24 = vld [vmem:[%s0 + $0x40] sm:$0xff]
  %v25 = vld [vmem:[%s0 + $0x48] sm:$0xff]
  %v26 = vld [vmem:[%s0 + $0x50] sm:$0xff]
  %v27 = vld [vmem:[%s0 + $0x58] sm:$0xff]
  %v28 = vld [vmem:[%s0 + $0x60] sm:$0xff]
  %v29 = vld [vmem:[%s0 + $0x68] sm:$0xff]
  %v30 = vld [vmem:[%s0 + $0x70] sm:$0xff]
  %v31 = vld [vmem:[%s0 + $0x78] sm:$0xff]
  %v32 = vld [vmem:[%s0 + $0x80] sm:$0xff]
  %v33 = vld [vmem:[%s0 + $0x88] sm:$0xff]
  %v34 = vld [vmem:[%s0 + $0x90] sm:$0xff]
  %v35 = vld [vmem:[%s0 + $0x98] sm:$0xff]
  %v36 = vld [vmem:[%s0 + $0xa0] sm:$0xff]
  %v37 = vld [vmem:[%s0 + $0xa8] sm:$0xff]
  %v38 = vld [vmem:[%s0 + $0xb0] sm:$0xff]
  %v39 = vld [vmem:[%s0 + $0xb8] sm:$0xff]
  %v40 = vld [vmem:[%s0 + $0xc0] sm:$0xff]
  %v41 = vld [vmem:[%s0 + $0xc8] sm:$0xff]
  %v42 = vld [vmem:[%s0 + $0xd0] sm:$0xff]
  %v43 = vld [vmem:[%s0 + $0xd8] sm:$0xff]
  %v44 = vld [vmem:[%s0 + $0xe0] sm:$0xff]
  %v45 = vld [vmem:[%s0 + $0xe8] sm:$0xff]
  %v46 = vld [vmem:[%s0 + $0xf0] sm:$0xff]
  %v47 = vld [vmem:[%s0 + $0xf8] sm:$0xff]
  %s48 = sld [smem:[#allocation2]]
  %v49 = vstv %s48
  %v51 = vlaneseq
  %v52 = vshrl.u32 %v51, 7
  %v53 = vsub.s32 0, %v52
  %v54 = vrot.slane %v15, %v53
  %v55 = vlaneseq
  %v56 = vshrl.u32 %v55, 7
  %v57 = vsub.s32 1, %v56
  %v58 = vrot.slane %v15, %v57
  %61 = vmatprep.subr.mxu0 0.0
  %v62 = vand.u32 %v16, 4294901760
  %63 = vmatpush1.msra.mxu0 %v62
  %64 = vmatprep.subr.mxu0 0.0
  %v65 = vand.u32 %v17, 4294901760
  %66 = vmatpush1.msra.mxu0 %v65
  %67 = vmatprep.subr.mxu0 0.0
  %v68 = vand.u32 %v18, 4294901760
  %69 = vmatpush1.msra.mxu0 %v68
  %70 = vmatprep.subr.mxu0 0.0
  %v71 = vand.u32 %v19, 4294901760
  %72 = vmatpush1.msra.mxu0 %v71
  %73 = vmatprep.subr.mxu0 0.0
  %v74 = vand.u32 %v20, 4294901760
  %75 = vmatpush1.msra.mxu0 %v74
  %76 = vmatprep.subr.mxu0 0.0
  %v77 = vand.u32 %v21, 4294901760
  %78 = vmatpush1.msra.mxu0 %v77
  %79 = vmatprep.subr.mxu0 0.0
  %v80 = vand.u32 %v22, 4294901760
  %81 = vmatpush1.msra.mxu0 %v80
  %82 = vmatprep.subr.mxu0 0.0
  %v83 = vand.u32 %v23, 4294901760
  %84 = vmatpush1.msra.mxu0 %v83
  %85 = vmatprep.subr.mxu0 0.0
  %v86 = vand.u32 %v24, 4294901760
  %87 = vmatpush1.msra.mxu0 %v86
  %88 = vmatprep.subr.mxu0 0.0
  %v89 = vand.u32 %v25, 4294901760
  %90 = vmatpush1.msra.mxu0 %v89
  %91 = vmatprep.subr.mxu0 0.0
  %v92 = vand.u32 %v26, 4294901760
  %93 = vmatpush1.msra.mxu0 %v92
  %94 = vmatprep.subr.mxu0 0.0
  %v95 = vand.u32 %v27, 4294901760
  %96 = vmatpush1.msra.mxu0 %v95
  %97 = vmatprep.subr.mxu0 0.0
  %v98 = vand.u32 %v28, 4294901760
  %99 = vmatpush1.msra.mxu0 %v98
  %100 = vmatprep.subr.mxu0 0.0
  %v101 = vand.u32 %v29, 4294901760
  %102 = vmatpush1.msra.mxu0 %v101
  %103 = vmatprep.subr.mxu0 0.0
  %v104 = vand.u32 %v30, 4294901760
  %105 = vmatpush1.msra.mxu0 %v104
  %106 = vmatprep.subr.mxu0 0.0
  %v107 = vand.u32 %v31, 4294901760
  %108 = vmatpush1.msra.mxu0 %v107
  %109 = vmatprep.subr.mxu0 0.0
  %v110 = vand.u32 %v32, 4294901760
  %111 = vmatpush1.msra.mxu0 %v110
  %112 = vmatprep.subr.mxu0 0.0
  %v113 = vand.u32 %v33, 4294901760
  %114 = vmatpush1.msra.mxu0 %v113
  %115 = vmatprep.subr.mxu0 0.0
  %v116 = vand.u32 %v34, 4294901760
  %117 = vmatpush1.msra.mxu0 %v116
  %118 = vmatprep.subr.mxu0 0.0
  %v119 = vand.u32 %v35, 4294901760
  %120 = vmatpush1.msra.mxu0 %v119
  %121 = vmatprep.subr.mxu0 0.0
  %v122 = vand.u32 %v36, 4294901760
  %123 = vmatpush1.msra.mxu0 %v122
  %124 = vmatprep.subr.mxu0 0.0
  %v125 = vand.u32 %v37, 4294901760
  %126 = vmatpush1.msra.mxu0 %v125
  %127 = vmatprep.subr.mxu0 0.0
  %v128 = vand.u32 %v38, 4294901760
  %129 = vmatpush1.msra.mxu0 %v128
  %130 = vmatprep.subr.mxu0 0.0
  %v131 = vand.u32 %v39, 4294901760
  %132 = vmatpush1.msra.mxu0 %v131
  %133 = vmatprep.subr.mxu0 0.0
  %v134 = vand.u32 %v40, 4294901760
  %135 = vmatpush1.msra.mxu0 %v134
  %136 = vmatprep.subr.mxu0 0.0
  %v137 = vand.u32 %v41, 4294901760
  %138 = vmatpush1.msra.mxu0 %v137
  %139 = vmatprep.subr.mxu0 0.0
  %v140 = vand.u32 %v42, 4294901760
  %141 = vmatpush1.msra.mxu0 %v140
  %142 = vmatprep.subr.mxu0 0.0
  %v143 = vand.u32 %v43, 4294901760
  %144 = vmatpush1.msra.mxu0 %v143
  %145 = vmatprep.subr.mxu0 0.0
  %v146 = vand.u32 %v44, 4294901760
  %147 = vmatpush1.msra.mxu0 %v146
  %148 = vmatprep.subr.mxu0 0.0
  %v149 = vand.u32 %v45, 4294901760
  %150 = vmatpush1.msra.mxu0 %v149
  %151 = vmatprep.subr.mxu0 0.0
  %v152 = vand.u32 %v46, 4294901760
  %153 = vmatpush1.msra.mxu0 %v152
  %154 = vmatprep.subr.mxu0 0.0
  %v155 = vand.u32 %v47, 4294901760
  %156 = vmatpush1.msra.mxu0 %v155
  %v157 = vand.u32 %v58, 4294901760
  %v158 = vsub.f32 %v58, %v157
  %v159 = vand.u32 %v158, 4294901760
  %v160 = vsub.f32 %v158, %v159
  %v161 = vand.u32 %v160, 4294901760
  %162 = vmatprep.mubr.f32.mxu0 %v161
  %v163 = vand.u32 %v54, 4294901760
  %v164 = vsub.f32 %v54, %v163
  %v165 = vand.u32 %v164, 4294901760
  %v166 = vsub.f32 %v164, %v165
  %v167 = vand.u32 %v166, 4294901760
  %168 = vmatmul.mubr.f32.gmra.mrb[0].mxu0 %v167
  %v169 = vpop.f32.mrb[0].mxu0
  %v170 = vadd.f32 %v49, %v169
  %v171 = vpop.f32.mrb[0].mxu0
  %172 = vdwg.mxu0
  %173 = vmatprep.subr.mxu0 0.0
  %v174 = vand.u32 %v16, 4294901760
  %v175 = vsub.f32 %v16, %v174
  %v176 = vand.u32 %v175, 4294901760
  %v177 = vsub.f32 %v175, %v176
  %v178 = vand.u32 %v177, 4294901760
  %179 = vmatpush1.msra.mxu0 %v178
  %180 = vmatprep.subr.mxu0 0.0
  %v181 = vand.u32 %v17, 4294901760
  %v182 = vsub.f32 %v17, %v181
  %v183 = vand.u32 %v182, 4294901760
  %v184 = vsub.f32 %v182, %v183
  %v185 = vand.u32 %v184, 4294901760
  %186 = vmatpush1.msra.mxu0 %v185
  %187 = vmatprep.subr.mxu0 0.0
  %v188 = vand.u32 %v18, 4294901760
  %v189 = vsub.f32 %v18, %v188
  %v190 = vand.u32 %v189, 4294901760
  %v191 = vsub.f32 %v189, %v190
  %v192 = vand.u32 %v191, 4294901760
  %193 = vmatpush1.msra.mxu0 %v192
  %194 = vmatprep.subr.mxu0 0.0
  %v195 = vand.u32 %v19, 4294901760
  %v196 = vsub.f32 %v19, %v195
  %v197 = vand.u32 %v196, 4294901760
  %v198 = vsub.f32 %v196, %v197
  %v199 = vand.u32 %v198, 4294901760
  %200 = vmatpush1.msra.mxu0 %v199
  %201 = vmatprep.subr.mxu0 0.0
  %v202 = vand.u32 %v20, 4294901760
  %v203 = vsub.f32 %v20, %v202
  %v204 = vand.u32 %v203, 4294901760
  %v205 = vsub.f32 %v203, %v204
  %v206 = vand.u32 %v205, 4294901760
  %207 = vmatpush1.msra.mxu0 %v206
  %208 = vmatprep.subr.mxu0 0.0
  %v209 = vand.u32 %v21, 4294901760
  %v210 = vsub.f32 %v21, %v209
  %v211 = vand.u32 %v210, 4294901760
  %v212 = vsub.f32 %v210, %v211
  %v213 = vand.u32 %v212, 4294901760
  %214 = vmatpush1.msra.mxu0 %v213
  %215 = vmatprep.subr.mxu0 0.0
  %v216 = vand.u32 %v22, 4294901760
  %v217 = vsub.f32 %v22, %v216
  %v218 = vand.u32 %v217, 4294901760
  %v219 = vsub.f32 %v217, %v218
  %v220 = vand.u32 %v219, 4294901760
  %221 = vmatpush1.msra.mxu0 %v220
  %222 = vmatprep.subr.mxu0 0.0
  %v223 = vand.u32 %v23, 4294901760
  %v224 = vsub.f32 %v23, %v223
  %v225 = vand.u32 %v224, 4294901760
  %v226 = vsub.f32 %v224, %v225
  %v227 = vand.u32 %v226, 4294901760
  %228 = vmatpush1.msra.mxu0 %v227
  %229 = vmatprep.subr.mxu0 0.0
  %v230 = vand.u32 %v24, 4294901760
  %v231 = vsub.f32 %v24, %v230
  %v232 = vand.u32 %v231, 4294901760
  %v233 = vsub.f32 %v231, %v232
  %v234 = vand.u32 %v233, 4294901760
  %235 = vmatpush1.msra.mxu0 %v234
  %236 = vmatprep.subr.mxu0 0.0
  %v237 = vand.u32 %v25, 4294901760
  %v238 = vsub.f32 %v25, %v237
  %v239 = vand.u32 %v238, 4294901760
  %v240 = vsub.f32 %v238, %v239
  %v241 = vand.u32 %v240, 4294901760
  %242 = vmatpush1.msra.mxu0 %v241
  %243 = vmatprep.subr.mxu0 0.0
  %v244 = vand.u32 %v26, 4294901760
  %v245 = vsub.f32 %v26, %v244
  %v246 = vand.u32 %v245, 4294901760
  %v247 = vsub.f32 %v245, %v246
  %v248 = vand.u32 %v247, 4294901760
  %249 = vmatpush1.msra.mxu0 %v248
  %250 = vmatprep.subr.mxu0 0.0
  %v251 = vand.u32 %v27, 4294901760
  %v252 = vsub.f32 %v27, %v251
  %v253 = vand.u32 %v252, 4294901760
  %v254 = vsub.f32 %v252, %v253
  %v255 = vand.u32 %v254, 4294901760
  %256 = vmatpush1.msra.mxu0 %v255
  %257 = vmatprep.subr.mxu0 0.0
  %v258 = vand.u32 %v28, 4294901760
  %v259 = vsub.f32 %v28, %v258
  %v260 = vand.u32 %v259, 4294901760
  %v261 = vsub.f32 %v259, %v260
  %v262 = vand.u32 %v261, 4294901760
  %263 = vmatpush1.msra.mxu0 %v262
  %264 = vmatprep.subr.mxu0 0.0
  %v265 = vand.u32 %v29, 4294901760
  %v266 = vsub.f32 %v29, %v265
  %v267 = vand.u32 %v266, 4294901760
  %v268 = vsub.f32 %v266, %v267
  %v269 = vand.u32 %v268, 4294901760
  %270 = vmatpush1.msra.mxu0 %v269
  %271 = vmatprep.subr.mxu0 0.0
  %v272 = vand.u32 %v30, 4294901760
  %v273 = vsub.f32 %v30, %v272
  %v274 = vand.u32 %v273, 4294901760
  %v275 = vsub.f32 %v273, %v274
  %v276 = vand.u32 %v275, 4294901760
  %277 = vmatpush1.msra.mxu0 %v276
  %278 = vmatprep.subr.mxu0 0.0
  %v279 = vand.u32 %v31, 4294901760
  %v280 = vsub.f32 %v31, %v279
  %v281 = vand.u32 %v280, 4294901760
  %v282 = vsub.f32 %v280, %v281
  %v283 = vand.u32 %v282, 4294901760
  %284 = vmatpush1.msra.mxu0 %v283
  %285 = vmatprep.subr.mxu0 0.0
  %v286 = vand.u32 %v32, 4294901760
  %v287 = vsub.f32 %v32, %v286
  %v288 = vand.u32 %v287, 4294901760
  %v289 = vsub.f32 %v287, %v288
  %v290 = vand.u32 %v289, 4294901760
  %291 = vmatpush1.msra.mxu0 %v290
  %292 = vmatprep.subr.mxu0 0.0
  %v293 = vand.u32 %v33, 4294901760
  %v294 = vsub.f32 %v33, %v293
  %v295 = vand.u32 %v294, 4294901760
  %v296 = vsub.f32 %v294, %v295
  %v297 = vand.u32 %v296, 4294901760
  %298 = vmatpush1.msra.mxu0 %v297
  %299 = vmatprep.subr.mxu0 0.0
  %v300 = vand.u32 %v34, 4294901760
  %v301 = vsub.f32 %v34, %v300
  %v302 = vand.u32 %v301, 4294901760
  %v303 = vsub.f32 %v301, %v302
  %v304 = vand.u32 %v303, 4294901760
  %305 = vmatpush1.msra.mxu0 %v304
  %306 = vmatprep.subr.mxu0 0.0
  %v307 = vand.u32 %v35, 4294901760
  %v308 = vsub.f32 %v35, %v307
  %v309 = vand.u32 %v308, 4294901760
  %v310 = vsub.f32 %v308, %v309
  %v311 = vand.u32 %v310, 4294901760
  %312 = vmatpush1.msra.mxu0 %v311
  %313 = vmatprep.subr.mxu0 0.0
  %v314 = vand.u32 %v36, 4294901760
  %v315 = vsub.f32 %v36, %v314
  %v316 = vand.u32 %v315, 4294901760
  %v317 = vsub.f32 %v315, %v316
  %v318 = vand.u32 %v317, 4294901760
  %319 = vmatpush1.msra.mxu0 %v318
  %320 = vmatprep.subr.mxu0 0.0
  %v321 = vand.u32 %v37, 4294901760
  %v322 = vsub.f32 %v37, %v321
  %v323 = vand.u32 %v322, 4294901760
  %v324 = vsub.f32 %v322, %v323
  %v325 = vand.u32 %v324, 4294901760
  %326 = vmatpush1.msra.mxu0 %v325
  %327 = vmatprep.subr.mxu0 0.0
  %v328 = vand.u32 %v38, 4294901760
  %v329 = vsub.f32 %v38, %v328
  %v330 = vand.u32 %v329, 4294901760
  %v331 = vsub.f32 %v329, %v330
  %v332 = vand.u32 %v331, 4294901760
  %333 = vmatpush1.msra.mxu0 %v332
  %334 = vmatprep.subr.mxu0 0.0
  %v335 = vand.u32 %v39, 4294901760
  %v336 = vsub.f32 %v39, %v335
  %v337 = vand.u32 %v336, 4294901760
  %v338 = vsub.f32 %v336, %v337
  %v339 = vand.u32 %v338, 4294901760
  %340 = vmatpush1.msra.mxu0 %v339
  %341 = vmatprep.subr.mxu0 0.0
  %v342 = vand.u32 %v40, 4294901760
  %v343 = vsub.f32 %v40, %v342
  %v344 = vand.u32 %v343, 4294901760
  %v345 = vsub.f32 %v343, %v344
  %v346 = vand.u32 %v345, 4294901760
  %347 = vmatpush1.msra.mxu0 %v346
  %348 = vmatprep.subr.mxu0 0.0
  %v349 = vand.u32 %v41, 4294901760
  %v350 = vsub.f32 %v41, %v349
  %v351 = vand.u32 %v350, 4294901760
  %v352 = vsub.f32 %v350, %v351
  %v353 = vand.u32 %v352, 4294901760
  %354 = vmatpush1.msra.mxu0 %v353
  %355 = vmatprep.subr.mxu0 0.0
  %v356 = vand.u32 %v42, 4294901760
  %v357 = vsub.f32 %v42, %v356
  %v358 = vand.u32 %v357, 4294901760
  %v359 = vsub.f32 %v357, %v358
  %v360 = vand.u32 %v359, 4294901760
  %361 = vmatpush1.msra.mxu0 %v360
  %362 = vmatprep.subr.mxu0 0.0
  %v363 = vand.u32 %v43, 4294901760
  %v364 = vsub.f32 %v43, %v363
  %v365 = vand.u32 %v364, 4294901760
  %v366 = vsub.f32 %v364, %v365
  %v367 = vand.u32 %v366, 4294901760
  %368 = vmatpush1.msra.mxu0 %v367
  %369 = vmatprep.subr.mxu0 0.0
  %v370 = vand.u32 %v44, 4294901760
  %v371 = vsub.f32 %v44, %v370
  %v372 = vand.u32 %v371, 4294901760
  %v373 = vsub.f32 %v371, %v372
  %v374 = vand.u32 %v373, 4294901760
  %375 = vmatpush1.msra.mxu0 %v374
  %376 = vmatprep.subr.mxu0 0.0
  %v377 = vand.u32 %v45, 4294901760
  %v378 = vsub.f32 %v45, %v377
  %v379 = vand.u32 %v378, 4294901760
  %v380 = vsub.f32 %v378, %v379
  %v381 = vand.u32 %v380, 4294901760
  %382 = vmatpush1.msra.mxu0 %v381
  %383 = vmatprep.subr.mxu0 0.0
  %v384 = vand.u32 %v46, 4294901760
  %v385 = vsub.f32 %v46, %v384
  %v386 = vand.u32 %v385, 4294901760
  %v387 = vsub.f32 %v385, %v386
  %v388 = vand.u32 %v387, 4294901760
  %389 = vmatpush1.msra.mxu0 %v388
  %390 = vmatprep.subr.mxu0 0.0
  %v391 = vand.u32 %v47, 4294901760
  %v392 = vsub.f32 %v47, %v391
  %v393 = vand.u32 %v392, 4294901760
  %v394 = vsub.f32 %v392, %v393
  %v395 = vand.u32 %v394, 4294901760
  %396 = vmatpush1.msra.mxu0 %v395
  %v397 = vand.u32 %v58, 4294901760
  %398 = vmatprep.mubr.f32.mxu0 %v397
  %v399 = vand.u32 %v54, 4294901760
  %400 = vmatmul.mubr.f32.gmra.mrb[0].mxu0 %v399
  %v401 = vpop.f32.mrb[0].mxu0
  %v402 = vadd.f32 %v170, %v401
  %v403 = vpop.f32.mrb[0].mxu0
  %404 = vdwg.mxu0
  %405 = vmatprep.subr.mxu0 0.0
  %v406 = vand.u32 %v16, 4294901760
  %v407 = vsub.f32 %v16, %v406
  %408 = vmatpush1.msra.mxu0 %v407
  %409 = vmatprep.subr.mxu0 0.0
  %v410 = vand.u32 %v17, 4294901760
  %v411 = vsub.f32 %v17, %v410
  %412 = vmatpush1.msra.mxu0 %v411
  %413 = vmatprep.subr.mxu0 0.0
  %v414 = vand.u32 %v18, 4294901760
  %v415 = vsub.f32 %v18, %v414
  %416 = vmatpush1.msra.mxu0 %v415
  %417 = vmatprep.subr.mxu0 0.0
  %v418 = vand.u32 %v19, 4294901760
  %v419 = vsub.f32 %v19, %v418
  %420 = vmatpush1.msra.mxu0 %v419
  %421 = vmatprep.subr.mxu0 0.0
  %v422 = vand.u32 %v20, 4294901760
  %v423 = vsub.f32 %v20, %v422
  %424 = vmatpush1.msra.mxu0 %v423
  %425 = vmatprep.subr.mxu0 0.0
  %v426 = vand.u32 %v21, 4294901760
  %v427 = vsub.f32 %v21, %v426
  %428 = vmatpush1.msra.mxu0 %v427
  %429 = vmatprep.subr.mxu0 0.0
  %v430 = vand.u32 %v22, 4294901760
  %v431 = vsub.f32 %v22, %v430
  %432 = vmatpush1.msra.mxu0 %v431
  %433 = vmatprep.subr.mxu0 0.0
  %v434 = vand.u32 %v23, 4294901760
  %v435 = vsub.f32 %v23, %v434
  %436 = vmatpush1.msra.mxu0 %v435
  %437 = vmatprep.subr.mxu0 0.0
  %v438 = vand.u32 %v24, 4294901760
  %v439 = vsub.f32 %v24, %v438
  %440 = vmatpush1.msra.mxu0 %v439
  %441 = vmatprep.subr.mxu0 0.0
  %v442 = vand.u32 %v25, 4294901760
  %v443 = vsub.f32 %v25, %v442
  %444 = vmatpush1.msra.mxu0 %v443
  %445 = vmatprep.subr.mxu0 0.0
  %v446 = vand.u32 %v26, 4294901760
  %v447 = vsub.f32 %v26, %v446
  %448 = vmatpush1.msra.mxu0 %v447
  %449 = vmatprep.subr.mxu0 0.0
  %v450 = vand.u32 %v27, 4294901760
  %v451 = vsub.f32 %v27, %v450
  %452 = vmatpush1.msra.mxu0 %v451
  %453 = vmatprep.subr.mxu0 0.0
  %v454 = vand.u32 %v28, 4294901760
  %v455 = vsub.f32 %v28, %v454
  %456 = vmatpush1.msra.mxu0 %v455
  %457 = vmatprep.subr.mxu0 0.0
  %v458 = vand.u32 %v29, 4294901760
  %v459 = vsub.f32 %v29, %v458
  %460 = vmatpush1.msra.mxu0 %v459
  %461 = vmatprep.subr.mxu0 0.0
  %v462 = vand.u32 %v30, 4294901760
  %v463 = vsub.f32 %v30, %v462
  %464 = vmatpush1.msra.mxu0 %v463
  %465 = vmatprep.subr.mxu0 0.0
  %v466 = vand.u32 %v31, 4294901760
  %v467 = vsub.f32 %v31, %v466
  %468 = vmatpush1.msra.mxu0 %v467
  %469 = vmatprep.subr.mxu0 0.0
  %v470 = vand.u32 %v32, 4294901760
  %v471 = vsub.f32 %v32, %v470
  %472 = vmatpush1.msra.mxu0 %v471
  %473 = vmatprep.subr.mxu0 0.0
  %v474 = vand.u32 %v33, 4294901760
  %v475 = vsub.f32 %v33, %v474
  %476 = vmatpush1.msra.mxu0 %v475
  %477 = vmatprep.subr.mxu0 0.0
  %v478 = vand.u32 %v34, 4294901760
  %v479 = vsub.f32 %v34, %v478
  %480 = vmatpush1.msra.mxu0 %v479
  %481 = vmatprep.subr.mxu0 0.0
  %v482 = vand.u32 %v35, 4294901760
  %v483 = vsub.f32 %v35, %v482
  %484 = vmatpush1.msra.mxu0 %v483
  %485 = vmatprep.subr.mxu0 0.0
  %v486 = vand.u32 %v36, 4294901760
  %v487 = vsub.f32 %v36, %v486
  %488 = vmatpush1.msra.mxu0 %v487
  %489 = vmatprep.subr.mxu0 0.0
  %v490 = vand.u32 %v37, 4294901760
  %v491 = vsub.f32 %v37, %v490
  %492 = vmatpush1.msra.mxu0 %v491
  %493 = vmatprep.subr.mxu0 0.0
  %v494 = vand.u32 %v38, 4294901760
  %v495 = vsub.f32 %v38, %v494
  %496 = vmatpush1.msra.mxu0 %v495
  %497 = vmatprep.subr.mxu0 0.0
  %v498 = vand.u32 %v39, 4294901760
  %v499 = vsub.f32 %v39, %v498
  %500 = vmatpush1.msra.mxu0 %v499
  %501 = vmatprep.subr.mxu0 0.0
  %v502 = vand.u32 %v40, 4294901760
  %v503 = vsub.f32 %v40, %v502
  %504 = vmatpush1.msra.mxu0 %v503
  %505 = vmatprep.subr.mxu0 0.0
  %v506 = vand.u32 %v41, 4294901760
  %v507 = vsub.f32 %v41, %v506
  %508 = vmatpush1.msra.mxu0 %v507
  %509 = vmatprep.subr.mxu0 0.0
  %v510 = vand.u32 %v42, 4294901760
  %v511 = vsub.f32 %v42, %v510
  %512 = vmatpush1.msra.mxu0 %v511
  %513 = vmatprep.subr.mxu0 0.0
  %v514 = vand.u32 %v43, 4294901760
  %v515 = vsub.f32 %v43, %v514
  %516 = vmatpush1.msra.mxu0 %v515
  %517 = vmatprep.subr.mxu0 0.0
  %v518 = vand.u32 %v44, 4294901760
  %v519 = vsub.f32 %v44, %v518
  %520 = vmatpush1.msra.mxu0 %v519
  %521 = vmatprep.subr.mxu0 0.0
  %v522 = vand.u32 %v45, 4294901760
  %v523 = vsub.f32 %v45, %v522
  %524 = vmatpush1.msra.mxu0 %v523
  %525 = vmatprep.subr.mxu0 0.0
  %v526 = vand.u32 %v46, 4294901760
  %v527 = vsub.f32 %v46, %v526
  %528 = vmatpush1.msra.mxu0 %v527
  %529 = vmatprep.subr.mxu0 0.0
  %v530 = vand.u32 %v47, 4294901760
  %v531 = vsub.f32 %v47, %v530
  %532 = vmatpush1.msra.mxu0 %v531
  %v533 = vand.u32 %v58, 4294901760
  %v534 = vsub.f32 %v58, %v533
  %535 = vmatprep.mubr.f32.mxu0 %v534
  %v536 = vand.u32 %v54, 4294901760
  %v537 = vsub.f32 %v54, %v536
  %538 = vmatmul.mubr.f32.gmra.mrb[0].mxu0 %v537
  %v539 = vpop.f32.mrb[0].mxu0
  %v540 = vadd.f32 %v402, %v539
  %v541 = vpop.f32.mrb[0].mxu0
  %542 = vdwg.mxu0
  %543 = vmatprep.subr.mxu0 0.0
  %v544 = vand.u32 %v16, 4294901760
  %545 = vmatpush1.msra.mxu0 %v544
  %546 = vmatprep.subr.mxu0 0.0
  %v547 = vand.u32 %v17, 4294901760
  %548 = vmatpush1.msra.mxu0 %v547
  %549 = vmatprep.subr.mxu0 0.0
  %v550 = vand.u32 %v18, 4294901760
  %551 = vmatpush1.msra.mxu0 %v550
  %552 = vmatprep.subr.mxu0 0.0
  %v553 = vand.u32 %v19, 4294901760
  %554 = vmatpush1.msra.mxu0 %v553
  %555 = vmatprep.subr.mxu0 0.0
  %v556 = vand.u32 %v20, 4294901760
  %557 = vmatpush1.msra.mxu0 %v556
  %558 = vmatprep.subr.mxu0 0.0
  %v559 = vand.u32 %v21, 4294901760
  %560 = vmatpush1.msra.mxu0 %v559
  %561 = vmatprep.subr.mxu0 0.0
  %v562 = vand.u32 %v22, 4294901760
  %563 = vmatpush1.msra.mxu0 %v562
  %564 = vmatprep.subr.mxu0 0.0
  %v565 = vand.u32 %v23, 4294901760
  %566 = vmatpush1.msra.mxu0 %v565
  %567 = vmatprep.subr.mxu0 0.0
  %v568 = vand.u32 %v24, 4294901760
  %569 = vmatpush1.msra.mxu0 %v568
  %570 = vmatprep.subr.mxu0 0.0
  %v571 = vand.u32 %v25, 4294901760
  %572 = vmatpush1.msra.mxu0 %v571
  %573 = vmatprep.subr.mxu0 0.0
  %v574 = vand.u32 %v26, 4294901760
  %575 = vmatpush1.msra.mxu0 %v574
  %576 = vmatprep.subr.mxu0 0.0
  %v577 = vand.u32 %v27, 4294901760
  %578 = vmatpush1.msra.mxu0 %v577
  %579 = vmatprep.subr.mxu0 0.0
  %v580 = vand.u32 %v28, 4294901760
  %581 = vmatpush1.msra.mxu0 %v580
  %582 = vmatprep.subr.mxu0 0.0
  %v583 = vand.u32 %v29, 4294901760
  %584 = vmatpush1.msra.mxu0 %v583
  %585 = vmatprep.subr.mxu0 0.0
  %v586 = vand.u32 %v30, 4294901760
  %587 = vmatpush1.msra.mxu0 %v586
  %588 = vmatprep.subr.mxu0 0.0
  %v589 = vand.u32 %v31, 4294901760
  %590 = vmatpush1.msra.mxu0 %v589
  %591 = vmatprep.subr.mxu0 0.0
  %v592 = vand.u32 %v32, 4294901760
  %593 = vmatpush1.msra.mxu0 %v592
  %594 = vmatprep.subr.mxu0 0.0
  %v595 = vand.u32 %v33, 4294901760
  %596 = vmatpush1.msra.mxu0 %v595
  %597 = vmatprep.subr.mxu0 0.0
  %v598 = vand.u32 %v34, 4294901760
  %599 = vmatpush1.msra.mxu0 %v598
  %600 = vmatprep.subr.mxu0 0.0
  %v601 = vand.u32 %v35, 4294901760
  %602 = vmatpush1.msra.mxu0 %v601
  %603 = vmatprep.subr.mxu0 0.0
  %v604 = vand.u32 %v36, 4294901760
  %605 = vmatpush1.msra.mxu0 %v604
  %606 = vmatprep.subr.mxu0 0.0
  %v607 = vand.u32 %v37, 4294901760
  %608 = vmatpush1.msra.mxu0 %v607
  %609 = vmatprep.subr.mxu0 0.0
  %v610 = vand.u32 %v38, 4294901760
  %611 = vmatpush1.msra.mxu0 %v610
  %612 = vmatprep.subr.mxu0 0.0
  %v613 = vand.u32 %v39, 4294901760
  %614 = vmatpush1.msra.mxu0 %v613
  %615 = vmatprep.subr.mxu0 0.0
  %v616 = vand.u32 %v40, 4294901760
  %617 = vmatpush1.msra.mxu0 %v616
  %618 = vmatprep.subr.mxu0 0.0
  %v619 = vand.u32 %v41, 4294901760
  %620 = vmatpush1.msra.mxu0 %v619
  %621 = vmatprep.subr.mxu0 0.0
  %v622 = vand.u32 %v42, 4294901760
  %623 = vmatpush1.msra.mxu0 %v622
  %624 = vmatprep.subr.mxu0 0.0
  %v625 = vand.u32 %v43, 4294901760
  %626 = vmatpush1.msra.mxu0 %v625
  %627 = vmatprep.subr.mxu0 0.0
  %v628 = vand.u32 %v44, 4294901760
  %629 = vmatpush1.msra.mxu0 %v628
  %630 = vmatprep.subr.mxu0 0.0
  %v631 = vand.u32 %v45, 4294901760
  %632 = vmatpush1.msra.mxu0 %v631
  %633 = vmatprep.subr.mxu0 0.0
  %v634 = vand.u32 %v46, 4294901760
  %635 = vmatpush1.msra.mxu0 %v634
  %636 = vmatprep.subr.mxu0 0.0
  %v637 = vand.u32 %v47, 4294901760
  %638 = vmatpush1.msra.mxu0 %v637
  %v639 = vand.u32 %v58, 4294901760
  %v640 = vsub.f32 %v58, %v639
  %v641 = vand.u32 %v640, 4294901760
  %642 = vmatprep.mubr.f32.mxu0 %v641
  %v643 = vand.u32 %v54, 4294901760
  %v644 = vsub.f32 %v54, %v643
  %v645 = vand.u32 %v644, 4294901760
  %646 = vmatmul.mubr.f32.gmra.mrb[0].mxu0 %v645
  %v647 = vpop.f32.mrb[0].mxu0
  %v648 = vadd.f32 %v540, %v647
  %v649 = vpop.f32.mrb[0].mxu0
  %650 = vdwg.mxu0
  %651 = vmatprep.subr.mxu0 0.0
  %v652 = vand.u32 %v16, 4294901760
  %v653 = vsub.f32 %v16, %v652
  %v654 = vand.u32 %v653, 4294901760
  %655 = vmatpush1.msra.mxu0 %v654
  %656 = vmatprep.subr.mxu0 0.0
  %v657 = vand.u32 %v17, 4294901760
  %v658 = vsub.f32 %v17, %v657
  %v659 = vand.u32 %v658, 4294901760
  %660 = vmatpush1.msra.mxu0 %v659
  %661 = vmatprep.subr.mxu0 0.0
  %v662 = vand.u32 %v18, 4294901760
  %v663 = vsub.f32 %v18, %v662
  %v664 = vand.u32 %v663, 4294901760
  %665 = vmatpush1.msra.mxu0 %v664
  %666 = vmatprep.subr.mxu0 0.0
  %v667 = vand.u32 %v19, 4294901760
  %v668 = vsub.f32 %v19, %v667
  %v669 = vand.u32 %v668, 4294901760
  %670 = vmatpush1.msra.mxu0 %v669
  %671 = vmatprep.subr.mxu0 0.0
  %v672 = vand.u32 %v20, 4294901760
  %v673 = vsub.f32 %v20, %v672
  %v674 = vand.u32 %v673, 4294901760
  %675 = vmatpush1.msra.mxu0 %v674
  %676 = vmatprep.subr.mxu0 0.0
  %v677 = vand.u32 %v21, 4294901760
  %v678 = vsub.f32 %v21, %v677
  %v679 = vand.u32 %v678, 4294901760
  %680 = vmatpush1.msra.mxu0 %v679
  %681 = vmatprep.subr.mxu0 0.0
  %v682 = vand.u32 %v22, 4294901760
  %v683 = vsub.f32 %v22, %v682
  %v684 = vand.u32 %v683, 4294901760
  %685 = vmatpush1.msra.mxu0 %v684
  %686 = vmatprep.subr.mxu0 0.0
  %v687 = vand.u32 %v23, 4294901760
  %v688 = vsub.f32 %v23, %v687
  %v689 = vand.u32 %v688, 4294901760
  %690 = vmatpush1.msra.mxu0 %v689
  %691 = vmatprep.subr.mxu0 0.0
  %v692 = vand.u32 %v24, 4294901760
  %v693 = vsub.f32 %v24, %v692
  %v694 = vand.u32 %v693, 4294901760
  %695 = vmatpush1.msra.mxu0 %v694
  %696 = vmatprep.subr.mxu0 0.0
  %v697 = vand.u32 %v25, 4294901760
  %v698 = vsub.f32 %v25, %v697
  %v699 = vand.u32 %v698, 4294901760
  %700 = vmatpush1.msra.mxu0 %v699
  %701 = vmatprep.subr.mxu0 0.0
  %v702 = vand.u32 %v26, 4294901760
  %v703 = vsub.f32 %v26, %v702
  %v704 = vand.u32 %v703, 4294901760
  %705 = vmatpush1.msra.mxu0 %v704
  %706 = vmatprep.subr.mxu0 0.0
  %v707 = vand.u32 %v27, 4294901760
  %v708 = vsub.f32 %v27, %v707
  %v709 = vand.u32 %v708, 4294901760
  %710 = vmatpush1.msra.mxu0 %v709
  %711 = vmatprep.subr.mxu0 0.0
  %v712 = vand.u32 %v28, 4294901760
  %v713 = vsub.f32 %v28, %v712
  %v714 = vand.u32 %v713, 4294901760
  %715 = vmatpush1.msra.mxu0 %v714
  %716 = vmatprep.subr.mxu0 0.0
  %v717 = vand.u32 %v29, 4294901760
  %v718 = vsub.f32 %v29, %v717
  %v719 = vand.u32 %v718, 4294901760
  %720 = vmatpush1.msra.mxu0 %v719
  %721 = vmatprep.subr.mxu0 0.0
  %v722 = vand.u32 %v30, 4294901760
  %v723 = vsub.f32 %v30, %v722
  %v724 = vand.u32 %v723, 4294901760
  %725 = vmatpush1.msra.mxu0 %v724
  %726 = vmatprep.subr.mxu0 0.0
  %v727 = vand.u32 %v31, 4294901760
  %v728 = vsub.f32 %v31, %v727
  %v729 = vand.u32 %v728, 4294901760
  %730 = vmatpush1.msra.mxu0 %v729
  %731 = vmatprep.subr.mxu0 0.0
  %v732 = vand.u32 %v32, 4294901760
  %v733 = vsub.f32 %v32, %v732
  %v734 = vand.u32 %v733, 4294901760
  %735 = vmatpush1.msra.mxu0 %v734
  %736 = vmatprep.subr.mxu0 0.0
  %v737 = vand.u32 %v33, 4294901760
  %v738 = vsub.f32 %v33, %v737
  %v739 = vand.u32 %v738, 4294901760
  %740 = vmatpush1.msra.mxu0 %v739
  %741 = vmatprep.subr.mxu0 0.0
  %v742 = vand.u32 %v34, 4294901760
  %v743 = vsub.f32 %v34, %v742
  %v744 = vand.u32 %v743, 4294901760
  %745 = vmatpush1.msra.mxu0 %v744
  %746 = vmatprep.subr.mxu0 0.0
  %v747 = vand.u32 %v35, 4294901760
  %v748 = vsub.f32 %v35, %v747
  %v749 = vand.u32 %v748, 4294901760
  %750 = vmatpush1.msra.mxu0 %v749
  %751 = vmatprep.subr.mxu0 0.0
  %v752 = vand.u32 %v36, 4294901760
  %v753 = vsub.f32 %v36, %v752
  %v754 = vand.u32 %v753, 4294901760
  %755 = vmatpush1.msra.mxu0 %v754
  %756 = vmatprep.subr.mxu0 0.0
  %v757 = vand.u32 %v37, 4294901760
  %v758 = vsub.f32 %v37, %v757
  %v759 = vand.u32 %v758, 4294901760
  %760 = vmatpush1.msra.mxu0 %v759
  %761 = vmatprep.subr.mxu0 0.0
  %v762 = vand.u32 %v38, 4294901760
  %v763 = vsub.f32 %v38, %v762
  %v764 = vand.u32 %v763, 4294901760
  %765 = vmatpush1.msra.mxu0 %v764
  %766 = vmatprep.subr.mxu0 0.0
  %v767 = vand.u32 %v39, 4294901760
  %v768 = vsub.f32 %v39, %v767
  %v769 = vand.u32 %v768, 4294901760
  %770 = vmatpush1.msra.mxu0 %v769
  %771 = vmatprep.subr.mxu0 0.0
  %v772 = vand.u32 %v40, 4294901760
  %v773 = vsub.f32 %v40, %v772
  %v774 = vand.u32 %v773, 4294901760
  %775 = vmatpush1.msra.mxu0 %v774
  %776 = vmatprep.subr.mxu0 0.0
  %v777 = vand.u32 %v41, 4294901760
  %v778 = vsub.f32 %v41, %v777
  %v779 = vand.u32 %v778, 4294901760
  %780 = vmatpush1.msra.mxu0 %v779
  %781 = vmatprep.subr.mxu0 0.0
  %v782 = vand.u32 %v42, 4294901760
  %v783 = vsub.f32 %v42, %v782
  %v784 = vand.u32 %v783, 4294901760
  %785 = vmatpush1.msra.mxu0 %v784
  %786 = vmatprep.subr.mxu0 0.0
  %v787 = vand.u32 %v43, 4294901760
  %v788 = vsub.f32 %v43, %v787
  %v789 = vand.u32 %v788, 4294901760
  %790 = vmatpush1.msra.mxu0 %v789
  %791 = vmatprep.subr.mxu0 0.0
  %v792 = vand.u32 %v44, 4294901760
  %v793 = vsub.f32 %v44, %v792
  %v794 = vand.u32 %v793, 4294901760
  %795 = vmatpush1.msra.mxu0 %v794
  %796 = vmatprep.subr.mxu0 0.0
  %v797 = vand.u32 %v45, 4294901760
  %v798 = vsub.f32 %v45, %v797
  %v799 = vand.u32 %v798, 4294901760
  %800 = vmatpush1.msra.mxu0 %v799
  %801 = vmatprep.subr.mxu0 0.0
  %v802 = vand.u32 %v46, 4294901760
  %v803 = vsub.f32 %v46, %v802
  %v804 = vand.u32 %v803, 4294901760
  %805 = vmatpush1.msra.mxu0 %v804
  %806 = vmatprep.subr.mxu0 0.0
  %v807 = vand.u32 %v47, 4294901760
  %v808 = vsub.f32 %v47, %v807
  %v809 = vand.u32 %v808, 4294901760
  %810 = vmatpush1.msra.mxu0 %v809
  %v811 = vand.u32 %v58, 4294901760
  %812 = vmatprep.mubr.f32.mxu0 %v811
  %v813 = vand.u32 %v54, 4294901760
  %814 = vmatmul.mubr.f32.gmra.mrb[0].mxu0 %v813
  %v815 = vpop.f32.mrb[0].mxu0
  %v816 = vadd.f32 %v648, %v815
  %v817 = vpop.f32.mrb[0].mxu0
  %818 = vdwg.mxu0
  %819 = vmatprep.subr.mxu0 0.0
  %v820 = vand.u32 %v16, 4294901760
  %821 = vmatpush1.msra.mxu0 %v820
  %822 = vmatprep.subr.mxu0 0.0
  %v823 = vand.u32 %v17, 4294901760
  %824 = vmatpush1.msra.mxu0 %v823
  %825 = vmatprep.subr.mxu0 0.0
  %v826 = vand.u32 %v18, 4294901760
  %827 = vmatpush1.msra.mxu0 %v826
  %828 = vmatprep.subr.mxu0 0.0
  %v829 = vand.u32 %v19, 4294901760
  %830 = vmatpush1.msra.mxu0 %v829
  %831 = vmatprep.subr.mxu0 0.0
  %v832 = vand.u32 %v20, 4294901760
  %833 = vmatpush1.msra.mxu0 %v832
  %834 = vmatprep.subr.mxu0 0.0
  %v835 = vand.u32 %v21, 4294901760
  %836 = vmatpush1.msra.mxu0 %v835
  %837 = vmatprep.subr.mxu0 0.0
  %v838 = vand.u32 %v22, 4294901760
  %839 = vmatpush1.msra.mxu0 %v838
  %840 = vmatprep.subr.mxu0 0.0
  %v841 = vand.u32 %v23, 4294901760
  %842 = vmatpush1.msra.mxu0 %v841
  %843 = vmatprep.subr.mxu0 0.0
  %v844 = vand.u32 %v24, 4294901760
  %845 = vmatpush1.msra.mxu0 %v844
  %846 = vmatprep.subr.mxu0 0.0
  %v847 = vand.u32 %v25, 4294901760
  %848 = vmatpush1.msra.mxu0 %v847
  %849 = vmatprep.subr.mxu0 0.0
  %v850 = vand.u32 %v26, 4294901760
  %851 = vmatpush1.msra.mxu0 %v850
  %852 = vmatprep.subr.mxu0 0.0
  %v853 = vand.u32 %v27, 4294901760
  %854 = vmatpush1.msra.mxu0 %v853
  %855 = vmatprep.subr.mxu0 0.0
  %v856 = vand.u32 %v28, 4294901760
  %857 = vmatpush1.msra.mxu0 %v856
  %858 = vmatprep.subr.mxu0 0.0
  %v859 = vand.u32 %v29, 4294901760
  %860 = vmatpush1.msra.mxu0 %v859
  %861 = vmatprep.subr.mxu0 0.0
  %v862 = vand.u32 %v30, 4294901760
  %863 = vmatpush1.msra.mxu0 %v862
  %864 = vmatprep.subr.mxu0 0.0
  %v865 = vand.u32 %v31, 4294901760
  %866 = vmatpush1.msra.mxu0 %v865
  %867 = vmatprep.subr.mxu0 0.0
  %v868 = vand.u32 %v32, 4294901760
  %869 = vmatpush1.msra.mxu0 %v868
  %870 = vmatprep.subr.mxu0 0.0
  %v871 = vand.u32 %v33, 4294901760
  %872 = vmatpush1.msra.mxu0 %v871
  %873 = vmatprep.subr.mxu0 0.0
  %v874 = vand.u32 %v34, 4294901760
  %875 = vmatpush1.msra.mxu0 %v874
  %876 = vmatprep.subr.mxu0 0.0
  %v877 = vand.u32 %v35, 4294901760
  %878 = vmatpush1.msra.mxu0 %v877
  %879 = vmatprep.subr.mxu0 0.0
  %v880 = vand.u32 %v36, 4294901760
  %881 = vmatpush1.msra.mxu0 %v880
  %882 = vmatprep.subr.mxu0 0.0
  %v883 = vand.u32 %v37, 4294901760
  %884 = vmatpush1.msra.mxu0 %v883
  %885 = vmatprep.subr.mxu0 0.0
  %v886 = vand.u32 %v38, 4294901760
  %887 = vmatpush1.msra.mxu0 %v886
  %888 = vmatprep.subr.mxu0 0.0
  %v889 = vand.u32 %v39, 4294901760
  %890 = vmatpush1.msra.mxu0 %v889
  %891 = vmatprep.subr.mxu0 0.0
  %v892 = vand.u32 %v40, 4294901760
  %893 = vmatpush1.msra.mxu0 %v892
  %894 = vmatprep.subr.mxu0 0.0
  %v895 = vand.u32 %v41, 4294901760
  %896 = vmatpush1.msra.mxu0 %v895
  %897 = vmatprep.subr.mxu0 0.0
  %v898 = vand.u32 %v42, 4294901760
  %899 = vmatpush1.msra.mxu0 %v898
  %900 = vmatprep.subr.mxu0 0.0
  %v901 = vand.u32 %v43, 4294901760
  %902 = vmatpush1.msra.mxu0 %v901
  %903 = vmatprep.subr.mxu0 0.0
  %v904 = vand.u32 %v44, 4294901760
  %905 = vmatpush1.msra.mxu0 %v904
  %906 = vmatprep.subr.mxu0 0.0
  %v907 = vand.u32 %v45, 4294901760
  %908 = vmatpush1.msra.mxu0 %v907
  %909 = vmatprep.subr.mxu0 0.0
  %v910 = vand.u32 %v46, 4294901760
  %911 = vmatpush1.msra.mxu0 %v910
  %912 = vmatprep.subr.mxu0 0.0
  %v913 = vand.u32 %v47, 4294901760
  %914 = vmatpush1.msra.mxu0 %v913
  %v915 = vand.u32 %v58, 4294901760
  %916 = vmatprep.mubr.f32.mxu0 %v915
  %v917 = vand.u32 %v54, 4294901760
  %918 = vmatmul.mubr.f32.gmra.mrb[0].mxu0 %v917
  %v919 = vpop.f32.mrb[0].mxu0
  %v920 = vadd.f32 %v816, %v919
  %v921 = vpop.f32.mrb[0].mxu0
  %922 = vdwg.mxu0
  %923 = vst [vmem:[%s3] sm:$0x1] %v920
  // Predicated region
  $region14: #{circular_model_forward.1} parent=0 // pred_check
    _
  $region15: #{circular_model_forward.1} parent=0 // pred_check_branch
    %925 = sbr.rel (0) target = $region17
  $region16: #{circular_model_forward.1} parent=0 // pred_region
    _
  $region17: #{circular_model_forward.1} parent=0 // pred_fallthru
    _
  // Predicated region
  $region18: #{circular_model_forward.1} parent=0 // pred_check
    _
  $region19: #{circular_model_forward.1} parent=0 // pred_check_branch
    %927 = sbr.rel (0) target = $region21
  $region20: #{circular_model_forward.1} parent=0 // pred_region
    _
  $region21: #{circular_model_forward.1} parent=0 // pred_fallthru
    _

</llo_original>
